<compile_context>
chip_gen: v7x
topology: tpu7x:2x2x1
jax: 0.10.0
libtpu: 0.0.40
codegen_flags: <defaults>
</compile_context>

<pallas_src>
import numpy as np
import jax
import jax.numpy as jnp
from jax.experimental import pallas as pl
from jax.experimental.pallas import tpu as pltpu

# ----------------------------- constants ------------------------------------
N_FFT = 2048
HOP = 512
N_MELS = 32
MEL_PAD = 128                    # lane-dense mel/output width (slice to 32 later)
N_FREQ = N_FFT // 2 + 1          # 1025 (torch onesided); Nyquist bin dropped below
FREQ_TILE = 256                  # matches 256-wide MXU on v6e/v7x
FREQ_USED = 1024                 # bins 0..1023; bin 1024 has zero mel weight (exact)
KB = FREQ_USED // FREQ_TILE      # 4 frequency blocks
SAMPLE_RATE = 16000
CHUNK_SIZE = 16000               # defender_wav_variable_input default
AMIN = 1e-10
MAX_TILE_R = 512                 # row-block cap (VMEM-safe on v7x's 64 MiB)
VMEM_LIMIT_BYTES = 48 * 1024 * 1024


def _round_up(x, m):
    return ((x + m - 1) // m) * m


def _cdiv(a, b):
    return -(-a // b)


# --------------------- mel filterbank / DFT matrices (glue) -----------------
def _hz_to_mel_slaney(f):
    f = np.asarray(f, dtype=np.float64)
    f_sp = 200.0 / 3.0
    min_log_hz = 1000.0
    min_log_mel = min_log_hz / f_sp
    logstep = np.log(6.4) / 27.0
    safe = np.maximum(f, 1e-10)
    return np.where(f >= min_log_hz,
                    min_log_mel + np.log(safe / min_log_hz) / logstep,
                    f / f_sp)


def _mel_to_hz_slaney(m):
    m = np.asarray(m, dtype=np.float64)
    f_sp = 200.0 / 3.0
    min_log_hz = 1000.0
    min_log_mel = min_log_hz / f_sp
    logstep = np.log(6.4) / 27.0
    return np.where(m >= min_log_mel,
                    min_log_hz * np.exp(logstep * (m - min_log_mel)),
                    f_sp * m)


def melscale_fbanks_slaney(n_freqs, f_min, f_max, n_mels, sample_rate):
    all_freqs = np.linspace(0.0, sample_rate // 2, n_freqs)
    m_min = _hz_to_mel_slaney(f_min)
    m_max = _hz_to_mel_slaney(f_max)
    m_pts = np.linspace(m_min, m_max, n_mels + 2)
    f_pts = _mel_to_hz_slaney(m_pts)
    f_diff = f_pts[1:] - f_pts[:-1]
    slopes = f_pts[None, :] - all_freqs[:, None]            # (n_freqs, n_mels+2)
    down = -slopes[:, :-2] / f_diff[:-1]
    up = slopes[:, 2:] / f_diff[1:]
    fb = np.maximum(0.0, np.minimum(down, up))
    enorm = 2.0 / (f_pts[2:n_mels + 2] - f_pts[:n_mels])    # slaney norm
    fb = fb * enorm[None, :]
    return fb.astype(np.float32)                            # (n_freqs, n_mels)


def build_transform_constants():
    """Hann window folded into the DFT matrix; cos|sin fused per 256-wide tile.
       trig: (KB, N_FFT, 2*FREQ_TILE) bf16,  fb: (KB, FREQ_TILE, MEL_PAD) f32.
       Frequency bins limited to 0..1023 - the slaney filterbank weight at the
       Nyquist bin (8000 Hz, f_max == sr/2) is exactly zero, so this is exact."""
    n = np.arange(N_FFT, dtype=np.float64)
    hann = 0.5 - 0.5 * np.cos(2.0 * np.pi * n / N_FFT)      # periodic Hann
    k = np.arange(FREQ_USED, dtype=np.float64)
    ang = 2.0 * np.pi * np.outer(n, k) / N_FFT              # (n_fft, FREQ_USED)
    cos_m = (hann[:, None] * np.cos(ang)).astype(np.float32)
    sin_m = (hann[:, None] * np.sin(ang)).astype(np.float32)
    trig = np.zeros((KB, N_FFT, 2 * FREQ_TILE), np.float32)
    for t in range(KB):
        trig[t, :, :FREQ_TILE] = cos_m[:, t * FREQ_TILE:(t + 1) * FREQ_TILE]
        trig[t, :, FREQ_TILE:] = sin_m[:, t * FREQ_TILE:(t + 1) * FREQ_TILE]

    fb_full = melscale_fbanks_slaney(
        N_FREQ, 0.0, SAMPLE_RATE / 2.0, N_MELS, SAMPLE_RATE)  # (1025, 32)
    fb = np.zeros((KB, FREQ_TILE, MEL_PAD), np.float32)
    for t in range(KB):
        fb[t, :, :N_MELS] = fb_full[t * FREQ_TILE:(t + 1) * FREQ_TILE]

    # bf16 DFT constants halve the resident VMEM / HBM cost; MXU accumulates f32.
    return jnp.asarray(trig, dtype=jnp.bfloat16), jnp.asarray(fb)


# ----------------------------- Pallas kernels --------------------------------
def defender_wav_kernel(x_ref, o_ref):
    # synthetic waveform purifier: mild soft-clipping denoiser (elementwise)
    x = x_ref[...]
    o_ref[...] = 0.95 * x + 0.05 * jnp.tanh(x)


def defender_wav_variable_input(x):
    """x: (1, B, T).  Faithful to split_audio/defend/combine_chunks with
       chunk_size=16000, over_lap=0: the defender is pointwise, so chunking is
       an identity re-blocking and is executed as ONE gridded pallas_call over
       chunk-aligned column tiles (no host-side stack/concat copies)."""
    original_length = x.shape[-1]
    _, B, T = x.shape
    sig = x.reshape(B, T)
    n_chunks = max(1, _cdiv(T, CHUNK_SIZE))          # == len(split_audio(...))
    group = min(n_chunks, 4)                         # chunks per grid step
    n_groups = _cdiv(n_chunks, group)
    col_tile = group * CHUNK_SIZE                    # multiple of 128 lanes
    t_pad = n_groups * col_tile
    sig = jnp.pad(sig, ((0, 0), (0, t_pad - T)))     # last-chunk zero padding
    out = pl.pallas_call(
        defender_wav_kernel,
        out_shape=jax.ShapeDtypeStruct((B, t_pad), jnp.float32),
        grid_spec=pltpu.PrefetchScalarGridSpec(
            num_scalar_prefetch=0, grid=(n_groups,),
            in_specs=[pl.BlockSpec((B, col_tile), lambda i: (0, i))],
            out_specs=pl.BlockSpec((B, col_tile), lambda i: (0, i))),
        compiler_params=pltpu.CompilerParams(
            dimension_semantics=("parallel",)),
    )(sig)
    return out[:, :original_length].reshape(1, B, original_length)


def melspec_db_kernel(frames_ref, trig_ref, fb_ref, out_ref, acc_ref):
    # grid = (row_blocks, KB); frequency axis is the reduction (last / innermost).
    k = pl.program_id(1)

    @pl.when(k == 0)
    def _():
        acc_ref[...] = jnp.zeros_like(acc_ref)

    f = frames_ref[...]                               # (tile_r, N_FFT) bf16
    cs = trig_ref[k]                                  # (N_FFT, 2*FREQ_TILE) [cos|sin]
    # single fused MXU matmul for real+imag parts (f32 accumulation)
    reim = jnp.dot(f, cs, preferred_element_type=jnp.float32)   # (tile_r, 512)
    re = reim[:, :FREQ_TILE]
    im = reim[:, FREQ_TILE:]
    power = re * re + im * im                         # |STFT|^2 (f32)
    acc_ref[...] += jnp.dot(power, fb_ref[k],
                            preferred_element_type=jnp.float32)

    @pl.when(k == pl.num_programs(1) - 1)
    def _():
        # AmplitudeToDB(stype='power'): 10*log10(clamp(x, amin)) (ref=1, no top_db)
        out_ref[...] = 10.0 * jnp.log10(jnp.maximum(acc_ref[...], AMIN))


def melspec_db_pallas(frames_rows, trig, fb, tile_r):
    # frames_rows: (R, N_FFT) bf16, R a multiple of tile_r (tile_r multiple of 16)
    R = frames_rows.shape[0]
    grid = (R // tile_r, KB)
    return pl.pallas_call(
        melspec_db_kernel,
        out_shape=jax.ShapeDtypeStruct((R, MEL_PAD), jnp.float32),
        grid_spec=pltpu.PrefetchScalarGridSpec(
            num_scalar_prefetch=0, grid=grid,
            in_specs=[
                pl.BlockSpec((tile_r, N_FFT), lambda r, k: (r, 0)),
                # Constant block index -> constants are DMA'd once and stay
                # VMEM-resident for the whole grid (no per-row-block re-stream).
                pl.BlockSpec((KB, N_FFT, 2 * FREQ_TILE), lambda r, k: (0, 0, 0)),
                pl.BlockSpec((KB, FREQ_TILE, MEL_PAD), lambda r, k: (0, 0, 0)),
            ],
            out_specs=pl.BlockSpec((tile_r, MEL_PAD), lambda r, k: (r, 0)),
            scratch_shapes=[pltpu.VMEM((tile_r, MEL_PAD), jnp.float32)]),
        compiler_params=pltpu.CompilerParams(
            dimension_semantics=("parallel", "arbitrary"),
            vmem_limit_bytes=VMEM_LIMIT_BYTES),
    )(frames_rows, trig, fb)


def spk_encoder_kernel(x_ref, w_ref, b_ref, m_ref, o_ref):
    # x: (B*S_pad, D), w: (D, E), b: (1, E), m: (B_pad, B*S_pad) averaging matrix
    h = jnp.dot(x_ref[...], w_ref[...], preferred_element_type=jnp.float32)
    h = jnp.maximum(h + b_ref[...], 0.0)
    mean = jnp.dot(m_ref[...], h, preferred_element_type=jnp.float32)  # (B_pad, E)
    inv_norm = jax.lax.rsqrt(
        jnp.sum(mean * mean, axis=-1, keepdims=True) + 1e-6)
    o_ref[...] = mean * inv_norm


def spk_encoder_pallas(x2d, w, b, m):
    BS, D = x2d.shape
    Bn = m.shape[0]
    E = w.shape[1]
    return pl.pallas_call(
        spk_encoder_kernel,
        out_shape=jax.ShapeDtypeStruct((Bn, E), jnp.float32),
        grid_spec=pltpu.PrefetchScalarGridSpec(
            num_scalar_prefetch=0, grid=(1,),
            in_specs=[
                pl.BlockSpec((BS, D), lambda i: (0, 0)),
                pl.BlockSpec((D, E), lambda i: (0, 0)),
                pl.BlockSpec((1, E), lambda i: (0, 0)),
                pl.BlockSpec((Bn, BS), lambda i: (0, 0)),
            ],
            out_specs=pl.BlockSpec((Bn, E), lambda i: (0, 0))),
    )(x2d, w, b, m)


# ------------------------ module glue (plain JAX) ----------------------------
def frame_signal(sig):
    # sig: (B, T) -> frames (B, F, N_FFT) with torch.stft center padding.
    # MelSpectrogram was built with pad_mode='constant' -> zero padding.
    # Frames are materialized directly in bf16 (halves the 4x-overlap HBM write).
    pad = N_FFT // 2
    sigp = jnp.pad(sig, ((0, 0), (pad, pad)), mode="constant").astype(jnp.bfloat16)
    Tp = sigp.shape[-1]
    F = (Tp - N_FFT) // HOP + 1
    idx = (np.arange(F)[:, None] * HOP + np.arange(N_FFT)[None, :]).astype(np.int32)
    return sigp[:, idx], F


def choose_row_blocking(R):
    """Balanced row blocks: >=2 blocks when R >= 32 (v7x 2-TC utilization),
       block size balanced instead of padding to the next multiple of 512."""
    n_blocks = max(1, _cdiv(R, MAX_TILE_R))
    if n_blocks == 1 and R >= 32:
        n_blocks = 2
    tile_r = _round_up(_cdiv(R, n_blocks), 16)        # bf16-friendly rows
    return tile_r, tile_r * n_blocks


def wave2spect(x, trig, fb):
    # x: (1, B, T) -> (1, B, N_MELS, F)   (MelSpectrogram + AmplitudeToDB)
    _, B, T = x.shape
    sig = x.reshape(B, T)
    frames, F = frame_signal(sig)                     # (B, F, N_FFT) bf16
    R = B * F
    rows = frames.reshape(R, N_FFT)
    tile_r, R_pad = choose_row_blocking(R)
    rows = jnp.pad(rows, ((0, R_pad - R), (0, 0)))
    mel_rows = melspec_db_pallas(rows, trig, fb, tile_r)      # (R_pad, 128)
    mel = mel_rows[:R, :N_MELS].reshape(B, F, N_MELS)
    mel = jnp.transpose(mel, (0, 2, 1))               # (B, N_MELS, F)
    return mel[None]                                  # (1, B, N_MELS, F)


def speaker_encoder(mel, mel_slices, w, b):
    # mel: (B, N_MELS, F); mel_slices: list of (start, length), N_MELS*length == D
    B = mel.shape[0]
    num_slices = len(mel_slices)
    S_pad = _round_up(num_slices, 8)
    per_b = []
    for bidx in range(B):
        parts = [mel[bidx, :, s:s + L].reshape(-1) for (s, L) in mel_slices]
        xb = jnp.stack(parts, axis=0)                 # (S, D)
        xb = jnp.pad(xb, ((0, S_pad - num_slices), (0, 0)))
        per_b.append(xb)
    x2d = jnp.concatenate(per_b, axis=0)              # (B*S_pad, D)
    B_pad = _round_up(B, 8)                           # lane/sublane-friendly output
    m = np.zeros((B_pad, B * S_pad), np.float32)
    for bidx in range(B):
        m[bidx, bidx * S_pad: bidx * S_pad + num_slices] = 1.0 / num_slices
    emb = spk_encoder_pallas(x2d, w, b, jnp.asarray(m))       # (B_pad, E)
    return emb[:B]


def acoustic_system_forward(x, mel_slices, params):
    """AcousticSystem_robust.forward with defend=True, defense_method='DualPure',
       defense_type='wave', defender_spec=None, sample_rate=16000."""
    trig, fb, w_spk, b_spk = params
    if x.ndim == 2:
        x = x[None]                                   # unsqueeze(0) -> (1, B, T)
    out = defender_wav_variable_input(x)              # defender_wav (chunked)
    out = wave2spect(out, trig, fb)                   # Wave2Spect transform
    # defender_spec is None -> passthrough
    out = out[0]                                      # squeeze(0) -> (B, N_MELS, F)
    out = speaker_encoder(out, mel_slices, w_spk, b_spk)
    return out


# ---------------------------------- main -------------------------------------
if __name__ == "__main__":
    key = jax.random.PRNGKey(0)
    k_x, k_w, k_b = jax.random.split(key, 3)

    B, T = 2, 4096
    x = 0.1 * jax.random.normal(k_x, (B, T), jnp.float32)

    # speaker-encoder parameters (deterministic synthetic init)
    SLICE_LEN = 4
    D = N_MELS * SLICE_LEN        # 128
    E = 128
    w_spk = 0.05 * jax.random.normal(k_w, (D, E), jnp.float32)
    b_spk = 0.01 * jax.random.normal(k_b, (1, E), jnp.float32)

    trig, fb = build_transform_constants()
    params = (trig, fb, w_spk, b_spk)

    # mel_slices: (start_frame, length) windows over the F=9 mel frames
    mel_slices = [(0, SLICE_LEN), (2, SLICE_LEN), (4, SLICE_LEN)]

    emb = acoustic_system_forward(x, mel_slices, params)
    jax.block_until_ready(emb)
    assert emb.shape == (B, E) and emb.dtype == jnp.float32
    assert bool(jnp.all(jnp.isfinite(emb)))
    print("KERNEL_OK")
</pallas_src>

<mosaic_0001>
module attributes {stable_mosaic.version = 11 : i64} {
  func.func @defender_wav_kernel(%arg0: i32, %arg1: memref<2x16000xf32, #tpu.memory_space<vmem>>, %arg2: memref<2x16000xf32, #tpu.memory_space<vmem>>) attributes {dimension_semantics = [#tpu.dimension_semantics<parallel>], iteration_bounds = array<i64: 1>, scalar_prefetch = 0 : i64, scratch_operands = 0 : i64, tpu.core_type = #tpu.core_type<tc>, window_params = [{transform_indices = @transform_0, window_bounds = array<i64: 2, 16000>}, {transform_indices = @transform_1, window_bounds = array<i64: 2, 16000>}]} {
    %c0 = arith.constant 0 : index
    %c0_0 = arith.constant 0 : index
    %0 = vector.load %arg1[%c0, %c0_0] : memref<2x16000xf32, #tpu.memory_space<vmem>>, vector<2x16000xf32>
    %cst = arith.constant 0.949999988 : f32
    %1 = vector.broadcast %cst : f32 to vector<2x16000xf32>
    %2 = arith.mulf %1, %0 : vector<2x16000xf32>
    %3 = math.tanh %0 : vector<2x16000xf32>
    %cst_1 = arith.constant 5.000000e-02 : f32
    %4 = vector.broadcast %cst_1 : f32 to vector<2x16000xf32>
    %5 = arith.mulf %4, %3 : vector<2x16000xf32>
    %6 = arith.addf %2, %5 : vector<2x16000xf32>
    %c0_2 = arith.constant 0 : index
    %c0_3 = arith.constant 0 : index
    %7 = vector.load %arg2[%c0_2, %c0_3] : memref<2x16000xf32, #tpu.memory_space<vmem>>, vector<2x16000xf32>
    tpu.vector_store %arg2[%c0_2, %c0_3], %6 {strides = array<i32>} : memref<2x16000xf32, #tpu.memory_space<vmem>>, vector<2x16000xf32>,
    return
  }
  func.func @transform_0(%arg0: i32) -> (i32, i32) {
    %c0_i32 = arith.constant 0 : i32
    %c0_i32_0 = arith.constant 0 : i32
    return %c0_i32, %arg0 : i32, i32
  }
  func.func @transform_1(%arg0: i32) -> (i32, i32) {
    %c0_i32 = arith.constant 0 : i32
    %c0_i32_0 = arith.constant 0 : i32
    return %c0_i32, %arg0 : i32, i32
  }
}

</mosaic_0001>

<llo_original>
// kernel: tpu_custom_call.1
$region0: #{tpu_custom_call.1}
  #allocation0 [shape = 'u32[]', space=smem, size = 0x4, offset = 0x4, fixed_abs, tag = 'smem constant byte address 0x4 - core index']
  #allocation1 [shape = 'u32[144,128]{1,0:T(1,128)}', space=vmem, size = 0x12000, scoped, tag = 'internal scratch']
  %s0 = inlined_call_operand.hbm [shape: f32[2,16000], index: 0, kind: input, shape index: {}]
  %s1 = inlined_call_operand.hbm [shape: f32[2,16000], index: 1, kind: output, shape index: {}]
  %s2 = sld [smem:[#allocation0]]
  $region18: #{tpu_custom_call.1} parent=0
    _
  %s4 = ssub.s32 1, %s2
  %s5 = scalar_select 0, %s4, %s2
  $region1: #{tpu_custom_call.1} parent=0
    #allocation2 [shape = 'u8[128000]{0}', space=vmem, size = 0x1f400, scoped, tag = 'input window, operand 0, single buffered']
    #allocation3 [shape = 's32[1]{0}', space=sflag, size = 0x4, scoped, tag = 'scoped memory for tpu_custom_call.1']
    #allocation4 [shape = 's32[1]{0}', space=sflag, size = 0x4, scoped, tag = 'scoped memory for tpu_custom_call.1']
    #allocation5 [shape = 'u8[128000]{0}', space=vmem, size = 0x1f400, scoped, tag = 'output window, operand 0, single buffered']
    %6 = vsyncpa [#allocation3], 0
    %7 = vsyncpa [#allocation4], 0
    // Predicated region
    $region2: #{tpu_custom_call.1} parent=1 // pred_check
      _
    $region3: #{tpu_custom_call.1} parent=1 // pred_check_branch
      %9 = sbr.rel (0) target = $region5
    $region4: #{tpu_custom_call.1} parent=1 // pred_region
      %s11 = ssub.s32 4000, 4000
      %12 = vsyncadd [#allocation3], %s11
      %s14 = sshll.u32 [#allocation2], 4
      %s15 = int_to_ptr.vmem [resolvable:$true] %s14
      %17 = dma.hbm_to_vmem [thread:$0]  %s0, 4000, %s15, [#allocation3]
    $region5: #{tpu_custom_call.1} parent=1 // pred_fallthru
      _
    // Predicated region
    $region6: #{tpu_custom_call.1} parent=1 // pred_check
      _
    $region7: #{tpu_custom_call.1} parent=1 // pred_check_branch
      %19 = sbr.rel (0) target = $region9
    $region8: #{tpu_custom_call.1} parent=1 // pred_region
      %20 = dma.done [#allocation3], 4000
    $region9: #{tpu_custom_call.1} parent=1 // pred_fallthru
      _
    %v21 = vld [vmem:[#allocation2] sm:$0xff]
    %v22 = vld [vmem:[#allocation2 + $0x8] sm:$0xff]
    %v23 = vld [vmem:[#allocation2 + $0x10] sm:$0xff]
    %v24 = vld [vmem:[#allocation2 + $0x18] sm:$0xff]
    %v25 = vld [vmem:[#allocation2 + $0x20] sm:$0xff]
    %v26 = vld [vmem:[#allocation2 + $0x28] sm:$0xff]
    %v27 = vld [vmem:[#allocation2 + $0x30] sm:$0xff]
    %v28 = vld [vmem:[#allocation2 + $0x38] sm:$0xff]
    %v29 = vld [vmem:[#allocation2 + $0x40] sm:$0xff]
    %v30 = vld [vmem:[#allocation2 + $0x48] sm:$0xff]
    %v31 = vld [vmem:[#allocation2 + $0x50] sm:$0xff]
    %v32 = vld [vmem:[#allocation2 + $0x58] sm:$0xff]
    %v33 = vld [vmem:[#allocation2 + $0x60] sm:$0xff]
    %v34 = vld [vmem:[#allocation2 + $0x68] sm:$0xff]
    %v35 = vld [vmem:[#allocation2 + $0x70] sm:$0xff]
    %v36 = vld [vmem:[#allocation2 + $0x78] sm:$0xff]
    %v37 = vld [vmem:[#allocation2 + $0x80] sm:$0xff]
    %v38 = vld [vmem:[#allocation2 + $0x88] sm:$0xff]
    %v39 = vld [vmem:[#allocation2 + $0x90] sm:$0xff]
    %v40 = vld [vmem:[#allocation2 + $0x98] sm:$0xff]
    %v41 = vld [vmem:[#allocation2 + $0xa0] sm:$0xff]
    %v42 = vld [vmem:[#allocation2 + $0xa8] sm:$0xff]
    %v43 = vld [vmem:[#allocation2 + $0xb0] sm:$0xff]
    %v44 = vld [vmem:[#allocation2 + $0xb8] sm:$0xff]
    %v45 = vld [vmem:[#allocation2 + $0xc0] sm:$0xff]
    %v46 = vld [vmem:[#allocation2 + $0xc8] sm:$0xff]
    %v47 = vld [vmem:[#allocation2 + $0xd0] sm:$0xff]
    %v48 = vld [vmem:[#allocation2 + $0xd8] sm:$0xff]
    %v49 = vld [vmem:[#allocation2 + $0xe0] sm:$0xff]
    %v50 = vld [vmem:[#allocation2 + $0xe8] sm:$0xff]
    %v51 = vld [vmem:[#allocation2 + $0xf0] sm:$0xff]
    %v52 = vld [vmem:[#allocation2 + $0xf8] sm:$0x3]
    %v53 = vmul.f32 %v21, 0.95
    %v54 = vmul.f32 %v22, 0.95
    %v55 = vmul.f32 %v23, 0.95
    %v56 = vmul.f32 %v24, 0.95
    %v57 = vmul.f32 %v25, 0.95
    %v58 = vmul.f32 %v26, 0.95
    %v59 = vmul.f32 %v27, 0.95
    %v60 = vmul.f32 %v28, 0.95
    %v61 = vmul.f32 %v29, 0.95
    %v62 = vmul.f32 %v30, 0.95
    %v63 = vmul.f32 %v31, 0.95
    %v64 = vmul.f32 %v32, 0.95
    %v65 = vmul.f32 %v33, 0.95
    %v66 = vmul.f32 %v34, 0.95
    %v67 = vmul.f32 %v35, 0.95
    %v68 = vmul.f32 %v36, 0.95
    %v69 = vmul.f32 %v37, 0.95
    %v70 = vmul.f32 %v38, 0.95
    %v71 = vmul.f32 %v39, 0.95
    %v72 = vmul.f32 %v40, 0.95
    %v73 = vmul.f32 %v41, 0.95
    %v74 = vmul.f32 %v42, 0.95
    %v75 = vmul.f32 %v43, 0.95
    %v76 = vmul.f32 %v44, 0.95
    %v77 = vmul.f32 %v45, 0.95
    %v78 = vmul.f32 %v46, 0.95
    %v79 = vmul.f32 %v47, 0.95
    %v80 = vmul.f32 %v48, 0.95
    %v81 = vmul.f32 %v49, 0.95
    %v82 = vmul.f32 %v50, 0.95
    %v83 = vmul.f32 %v51, 0.95
    %v84 = vmul.f32 %v52, 0.95
    %v85 = vtanh.pop %v21
    %v86 = vtanh.pop %v22
    %v87 = vtanh.pop %v23
    %v88 = vtanh.pop %v24
    %v89 = vtanh.pop %v25
    %v90 = vtanh.pop %v26
    %v91 = vtanh.pop %v27
    %v92 = vtanh.pop %v28
    %v93 = vtanh.pop %v29
    %v94 = vtanh.pop %v30
    %v95 = vtanh.pop %v31
    %v96 = vtanh.pop %v32
    %v97 = vtanh.pop %v33
    %v98 = vtanh.pop %v34
    %v99 = vtanh.pop %v35
    %v100 = vtanh.pop %v36
    %v101 = vtanh.pop %v37
    %v102 = vtanh.pop %v38
    %v103 = vtanh.pop %v39
    %v104 = vtanh.pop %v40
    %v105 = vtanh.pop %v41
    %v106 = vtanh.pop %v42
    %v107 = vtanh.pop %v43
    %v108 = vtanh.pop %v44
    %v109 = vtanh.pop %v45
    %v110 = vtanh.pop %v46
    %v111 = vtanh.pop %v47
    %v112 = vtanh.pop %v48
    %v113 = vtanh.pop %v49
    %v114 = vtanh.pop %v50
    %v115 = vtanh.pop %v51
    %v116 = vtanh.pop %v52
    %v117 = vmul.f32 %v85, 0.05
    %v118 = vmul.f32 %v86, 0.05
    %v119 = vmul.f32 %v87, 0.05
    %v120 = vmul.f32 %v88, 0.05
    %v121 = vmul.f32 %v89, 0.05
    %v122 = vmul.f32 %v90, 0.05
    %v123 = vmul.f32 %v91, 0.05
    %v124 = vmul.f32 %v92, 0.05
    %v125 = vmul.f32 %v93, 0.05
    %v126 = vmul.f32 %v94, 0.05
    %v127 = vmul.f32 %v95, 0.05
    %v128 = vmul.f32 %v96, 0.05
    %v129 = vmul.f32 %v97, 0.05
    %v130 = vmul.f32 %v98, 0.05
    %v131 = vmul.f32 %v99, 0.05
    %v132 = vmul.f32 %v100, 0.05
    %v133 = vmul.f32 %v101, 0.05
    %v134 = vmul.f32 %v102, 0.05
    %v135 = vmul.f32 %v103, 0.05
    %v136 = vmul.f32 %v104, 0.05
    %v137 = vmul.f32 %v105, 0.05
    %v138 = vmul.f32 %v106, 0.05
    %v139 = vmul.f32 %v107, 0.05
    %v140 = vmul.f32 %v108, 0.05
    %v141 = vmul.f32 %v109, 0.05
    %v142 = vmul.f32 %v110, 0.05
    %v143 = vmul.f32 %v111, 0.05
    %v144 = vmul.f32 %v112, 0.05
    %v145 = vmul.f32 %v113, 0.05
    %v146 = vmul.f32 %v114, 0.05
    %v147 = vmul.f32 %v115, 0.05
    %v148 = vmul.f32 %v116, 0.05
    %v149 = vadd.f32 %v53, %v117
    %v150 = vadd.f32 %v54, %v118
    %v151 = vadd.f32 %v55, %v119
    %v152 = vadd.f32 %v56, %v120
    %v153 = vadd.f32 %v57, %v121
    %v154 = vadd.f32 %v58, %v122
    %v155 = vadd.f32 %v59, %v123
    %v156 = vadd.f32 %v60, %v124
    %v157 = vadd.f32 %v61, %v125
    %v158 = vadd.f32 %v62, %v126
    %v159 = vadd.f32 %v63, %v127
    %v160 = vadd.f32 %v64, %v128
    %v161 = vadd.f32 %v65, %v129
    %v162 = vadd.f32 %v66, %v130
    %v163 = vadd.f32 %v67, %v131
    %v164 = vadd.f32 %v68, %v132
    %v165 = vadd.f32 %v69, %v133
    %v166 = vadd.f32 %v70, %v134
    %v167 = vadd.f32 %v71, %v135
    %v168 = vadd.f32 %v72, %v136
    %v169 = vadd.f32 %v73, %v137
    %v170 = vadd.f32 %v74, %v138
    %v171 = vadd.f32 %v75, %v139
    %v172 = vadd.f32 %v76, %v140
    %v173 = vadd.f32 %v77, %v141
    %v174 = vadd.f32 %v78, %v142
    %v175 = vadd.f32 %v79, %v143
    %v176 = vadd.f32 %v80, %v144
    %v177 = vadd.f32 %v81, %v145
    %v178 = vadd.f32 %v82, %v146
    %v179 = vadd.f32 %v83, %v147
    %v180 = vadd.f32 %v84, %v148
    %181 = vst [vmem:[#allocation5] sm:$0xff] %v149
    %182 = vst [vmem:[#allocation5 + $0x8] sm:$0xff] %v150
    %183 = vst [vmem:[#allocation5 + $0x10] sm:$0xff] %v151
    %184 = vst [vmem:[#allocation5 + $0x18] sm:$0xff] %v152
    %185 = vst [vmem:[#allocation5 + $0x20] sm:$0xff] %v153
    %186 = vst [vmem:[#allocation5 + $0x28] sm:$0xff] %v154
    %187 = vst [vmem:[#allocation5 + $0x30] sm:$0xff] %v155
    %188 = vst [vmem:[#allocation5 + $0x38] sm:$0xff] %v156
    %189 = vst [vmem:[#allocation5 + $0x40] sm:$0xff] %v157
    %190 = vst [vmem:[#allocation5 + $0x48] sm:$0xff] %v158
    %191 = vst [vmem:[#allocation5 + $0x50] sm:$0xff] %v159
    %192 = vst [vmem:[#allocation5 + $0x58] sm:$0xff] %v160
    %193 = vst [vmem:[#allocation5 + $0x60] sm:$0xff] %v161
    %194 = vst [vmem:[#allocation5 + $0x68] sm:$0xff] %v162
    %195 = vst [vmem:[#allocation5 + $0x70] sm:$0xff] %v163
    %196 = vst [vmem:[#allocation5 + $0x78] sm:$0xff] %v164
    %197 = vst [vmem:[#allocation5 + $0x80] sm:$0xff] %v165
    %198 = vst [vmem:[#allocation5 + $0x88] sm:$0xff] %v166
    %199 = vst [vmem:[#allocation5 + $0x90] sm:$0xff] %v167
    %200 = vst [vmem:[#allocation5 + $0x98] sm:$0xff] %v168
    %201 = vst [vmem:[#allocation5 + $0xa0] sm:$0xff] %v169
    %202 = vst [vmem:[#allocation5 + $0xa8] sm:$0xff] %v170
    %203 = vst [vmem:[#allocation5 + $0xb0] sm:$0xff] %v171
    %204 = vst [vmem:[#allocation5 + $0xb8] sm:$0xff] %v172
    %205 = vst [vmem:[#allocation5 + $0xc0] sm:$0xff] %v173
    %206 = vst [vmem:[#allocation5 + $0xc8] sm:$0xff] %v174
    %207 = vst [vmem:[#allocation5 + $0xd0] sm:$0xff] %v175
    %208 = vst [vmem:[#allocation5 + $0xd8] sm:$0xff] %v176
    %209 = vst [vmem:[#allocation5 + $0xe0] sm:$0xff] %v177
    %210 = vst [vmem:[#allocation5 + $0xe8] sm:$0xff] %v178
    %211 = vst [vmem:[#allocation5 + $0xf0] sm:$0xff] %v179
    %212 = vst [vmem:[#allocation5 + $0xf8] sm:$0x3] %v180
    // Predicated region
    $region10: #{tpu_custom_call.1} parent=1 // pred_check
      _
    $region11: #{tpu_custom_call.1} parent=1 // pred_check_branch
      %214 = sbr.rel (0) target = $region13
    $region12: #{tpu_custom_call.1} parent=1 // pred_region
      %s216 = ssub.s32 4000, 4000
      %217 = vsyncadd [#allocation4], %s216
      %s219 = sshll.u32 [#allocation5], 4
      %s220 = int_to_ptr.vmem [resolvable:$true] %s219
      %222 = dma.vmem_to_hbm [thread:$0]  %s220, 4000, %s1, [#allocation4]
    $region13: #{tpu_custom_call.1} parent=1 // pred_fallthru
      _
    // Predicated region
    $region14: #{tpu_custom_call.1} parent=1 // pred_check
      _
    $region15: #{tpu_custom_call.1} parent=1 // pred_check_branch
      %224 = sbr.rel (0) target = $region17
    $region16: #{tpu_custom_call.1} parent=1 // pred_region
      %225 = dma.done [#allocation4], 4000
    $region17: #{tpu_custom_call.1} parent=1 // pred_fallthru
      _
    %226 = vsyncpa [#allocation3], 1
    %227 = vsyncpa [#allocation4], 1

</llo_original>
